<compile_context>
chip_gen: v7x
topology: tpu7x:2x2x1
jax: 0.10.0
libtpu: 0.0.40
codegen_flags: <defaults>
</compile_context>

<pallas_src>
import functools

import jax
import jax.numpy as jnp
from jax.experimental import pallas as pl
from jax.experimental.pallas import tpu as pltpu


def _round_up(x, m):
    return ((x + m - 1) // m) * m


def _vmem_physical_bytes():
    """Per-core VMEM capacity; conservative fallback when the query is unavailable."""
    try:
        info = pltpu.get_tpu_info()
        cap = getattr(info, "vmem_capacity_bytes", None)
        if cap:
            return int(cap)
    except Exception:
        pass
    return 64 * 1024 * 1024  # v7x per-TC size: safe lower bound for all generations


def _epilogue(acc_f32, s_ref, b_ref, o_ref, no_imgnorm, eps, approx_recip):
    """scale + bias + (optional) row l2-norm, all in f32; store in output dtype."""
    feat = acc_f32 * s_ref[0, 0] + b_ref[...]
    if not no_imgnorm:
        norm = jnp.sqrt(jnp.sum(feat * feat, axis=-1, keepdims=True)) + eps
        feat = feat * pl.reciprocal(norm, approx=approx_recip)
    o_ref[...] = feat.astype(o_ref.dtype)


def _resident_kernel(s_ref, x_ref, w_ref, b_ref, o_ref, *,
                     no_imgnorm, eps, approx_recip):
    """Whole K contracted in one shot; W block is VMEM-resident (constant index map)."""
    acc = jnp.dot(x_ref[...], w_ref[...], preferred_element_type=jnp.float32)
    _epilogue(acc, s_ref, b_ref, o_ref, no_imgnorm, eps, approx_recip)


def _tiled_kernel(s_ref, x_ref, w_ref, b_ref, o_ref, *scratch,
                  no_imgnorm, eps, approx_recip):
    """Fallback for very large W: grid = (M tiles, K tiles), K is the reduction axis.

    When the output dtype is f32 we accumulate directly into the resident output block
    (its index map returns (i, 0) for every k); otherwise an f32 scratch is used.
    """
    acc_ref = scratch[0] if scratch else o_ref
    k = pl.program_id(1)

    part = jnp.dot(x_ref[...], w_ref[...], preferred_element_type=jnp.float32)

    @pl.when(k == 0)
    def _():
        acc_ref[...] = part.astype(acc_ref.dtype)

    @pl.when(k != 0)
    def _():
        acc_ref[...] = (acc_ref[...].astype(jnp.float32) + part).astype(acc_ref.dtype)

    @pl.when(k == pl.num_programs(1) - 1)
    def _():
        _epilogue(acc_ref[...].astype(jnp.float32), s_ref, b_ref, o_ref,
                  no_imgnorm, eps, approx_recip)


def encoder_image_weightnorm_precomp(images, weight_v, weight_g, bias, *,
                                     no_imgnorm=False, weight_scale=None,
                                     use_bf16_matmul=False, approx_recip=False,
                                     tm=None, tk=None, eps=1e-8):
    """images: (..., img_dim); weight_v: (embed_size, img_dim); weight_g: scalar;
    bias: (embed_size,).  weight_scale (optional) = g / ||V||_F precomputed at setup."""
    orig_shape = images.shape
    img_dim = orig_shape[-1]
    embed_size = weight_v.shape[0]

    x = images.reshape(-1, img_dim)
    M = x.shape[0]
    out_dtype = images.dtype

    mx_dtype = jnp.bfloat16 if use_bf16_matmul else x.dtype
    mx_bytes = jnp.dtype(mx_dtype).itemsize
    out_bytes = jnp.dtype(out_dtype).itemsize
    sub = 16 if use_bf16_matmul else 8          # sublane multiple for the M tile

    E_pad = _round_up(embed_size, 128)          # lane-dense output; E stays un-tiled so
    K128 = _round_up(img_dim, 128)              # the row l2-norm sees the whole row

    # ---- VMEM budget (generation-aware: ~48 MiB on v7x, ~96 MiB on v5e/v6e) ----------
    phys = _vmem_physical_bytes()
    vmem_limit = max(32 * 1024 * 1024, min(int(0.75 * phys), 100 * 1024 * 1024))
    budget = int(0.85 * vmem_limit)

    # ---- M tiling: large tiles, but keep >= 2 "parallel" tiles for dual-TC sharding --
    M_su = _round_up(M, sub)
    if tm is None:
        tm_ = min(512, M_su)
        if pl.cdiv(M, tm_) < 2 and M >= 2 * sub:
            tm_ = _round_up(pl.cdiv(M, 2), sub)
    else:
        tm_ = tm
    tm_ = _round_up(min(tm_, M_su), sub)

    def vmem_est(tm_i, tk_i):
        return (2 * tm_i * tk_i * mx_bytes       # x tiles (double-buffered)
                + 2 * tk_i * E_pad * mx_bytes    # W tiles (counted double-buffered)
                + 2 * tm_i * E_pad * out_bytes   # output tiles (double-buffered)
                + tm_i * E_pad * 4               # f32 epilogue / acc temp
                + 4 * E_pad * 4)                 # bias + slack

    # ---- K tiling: keep W resident (single K block) whenever it fits the budget ------
    tk_ = K128 if tk is None else min(_round_up(tk, 128), K128)
    while vmem_est(tm_, tk_) > budget and tk_ > 128:
        tk_ = max(128, _round_up(tk_ // 2, 128))
    while vmem_est(tm_, tk_) > budget and tm_ > sub:
        tm_ = max(sub, _round_up(tm_ // 2, sub))

    resident = tk_ == K128
    K_pad = K128 if resident else _round_up(img_dim, tk_)

    # ---- operand prep: only the cheap K pad of x + small static weight/bias pads -----
    x_p = x
    if K_pad != img_dim:
        x_p = jnp.pad(x, ((0, 0), (0, K_pad - img_dim)))      # zero pad is exact
    if x_p.dtype != mx_dtype:
        x_p = x_p.astype(mx_dtype)

    # One-time transpose of the static weight -> (K_pad, E_pad): plain (1,0) contraction.
    w_p = jnp.pad(weight_v.T,
                  ((0, K_pad - img_dim), (0, E_pad - embed_size))).astype(mx_dtype)
    b_p = jnp.pad(bias, (0, E_pad - embed_size)).reshape(1, E_pad).astype(jnp.float32)

    if weight_scale is None:
        # TODO(synk): hoist this to model setup (weight is static "precomp") and always
        # pass weight_scale= to avoid re-reducing the weight on every forward call.
        weight_scale = weight_g / jnp.sqrt(jnp.sum(weight_v.astype(jnp.float32) ** 2))
    s = jnp.asarray(weight_scale, dtype=jnp.float32).reshape(1, 1)

    grid_m = pl.cdiv(M, tm_)

    if resident:
        grid = (grid_m,)
        in_specs = [
            pl.BlockSpec(memory_space=pltpu.MemorySpace.SMEM),      # s: (1,1) scalar
            pl.BlockSpec((tm_, K_pad), lambda i: (i, 0)),           # x tile
            pl.BlockSpec((K_pad, E_pad), lambda i: (0, 0)),         # W: fetched once
            pl.BlockSpec((1, E_pad), lambda i: (0, 0)),             # bias
        ]
        out_specs = pl.BlockSpec((tm_, E_pad), lambda i: (i, 0))
        scratch_shapes = []
        kernel = functools.partial(_resident_kernel, no_imgnorm=no_imgnorm,
                                   eps=eps, approx_recip=approx_recip)
        dims = ("parallel",)
    else:
        grid = (grid_m, K_pad // tk_)
        in_specs = [
            pl.BlockSpec(memory_space=pltpu.MemorySpace.SMEM),
            pl.BlockSpec((tm_, tk_), lambda i, k: (i, k)),
            pl.BlockSpec((tk_, E_pad), lambda i, k: (k, 0)),
            pl.BlockSpec((1, E_pad), lambda i, k: (0, 0)),
        ]
        out_specs = pl.BlockSpec((tm_, E_pad), lambda i, k: (i, 0))
        needs_acc = jnp.dtype(out_dtype) != jnp.dtype(jnp.float32)
        scratch_shapes = [pltpu.VMEM((tm_, E_pad), jnp.float32)] if needs_acc else []
        kernel = functools.partial(_tiled_kernel, no_imgnorm=no_imgnorm,
                                   eps=eps, approx_recip=approx_recip)
        dims = ("parallel", "arbitrary")

    out = pl.pallas_call(
        kernel,
        out_shape=jax.ShapeDtypeStruct((M, E_pad), out_dtype),
        grid_spec=pltpu.PrefetchScalarGridSpec(
            num_scalar_prefetch=0,
            grid=grid,
            in_specs=in_specs,
            out_specs=out_specs,
            scratch_shapes=scratch_shapes,
        ),
        compiler_params=pltpu.CompilerParams(
            dimension_semantics=dims,
            vmem_limit_bytes=int(vmem_limit),
        ),
    )(s, x_p, w_p, b_p)

    out = out[:, :embed_size]
    return out.reshape(*orig_shape[:-1], embed_size)


def _reference(images, weight_v, weight_g, bias, no_imgnorm=False):
    w_eff = (weight_g / jnp.sqrt(jnp.sum(weight_v * weight_v))) * weight_v
    feat = images @ w_eff.T + bias
    if not no_imgnorm:
        norm = jnp.sqrt(jnp.sum(feat * feat, axis=-1, keepdims=True)) + 1e-8
        feat = feat / norm
    return feat


if __name__ == "__main__":
    key = jax.random.PRNGKey(0)
    k1, k2, k3 = jax.random.split(key, 3)

    batch, n_regions, img_dim, embed_size = 2, 8, 32, 32

    images = jax.random.normal(k1, (batch, n_regions, img_dim), dtype=jnp.float32)
    # nn.Linear-style deterministic init
    weight_v = jax.random.uniform(
        k2, (embed_size, img_dim), minval=-1.0 / jnp.sqrt(img_dim),
        maxval=1.0 / jnp.sqrt(img_dim), dtype=jnp.float32)
    bias = jax.random.uniform(
        k3, (embed_size,), minval=-1.0 / jnp.sqrt(img_dim),
        maxval=1.0 / jnp.sqrt(img_dim), dtype=jnp.float32)
    # weight_norm(dim=None) initializes g = ||v||_F
    weight_g = jnp.sqrt(jnp.sum(weight_v * weight_v))

    # weight-norm scalar precomputed once at "setup" (static weight), per perf review
    scale = weight_g / jnp.sqrt(jnp.sum(weight_v * weight_v))

    out = encoder_image_weightnorm_precomp(images, weight_v, weight_g, bias,
                                           weight_scale=scale)
    out = jax.block_until_ready(out)

    ref = _reference(images, weight_v, weight_g, bias)
    assert out.shape == (batch, n_regions, embed_size)
    assert jnp.allclose(out, ref, atol=1e-5, rtol=1e-5)

    print("KERNEL_OK")
</pallas_src>

<mosaic_0001>
module attributes {stable_mosaic.version = 11 : i64} {
  func.func @_resident_kernel(%arg0: i32, %arg1: memref<1x1xf32, #tpu.memory_space<smem>>, %arg2: memref<8x128xf32, #tpu.memory_space<vmem>>, %arg3: memref<128x128xf32, #tpu.memory_space<vmem>>, %arg4: memref<1x128xf32, #tpu.memory_space<vmem>>, %arg5: memref<8x128xf32, #tpu.memory_space<vmem>>) attributes {dimension_semantics = [#tpu.dimension_semantics<parallel>], iteration_bounds = array<i64: 2>, scalar_prefetch = 0 : i64, scratch_operands = 0 : i64, tpu.core_type = #tpu.core_type<tc>, window_params = [{transform_indices = @transform_0, window_bounds = array<i64: 1, 1>}, {transform_indices = @transform_1, window_bounds = array<i64: 8, 128>}, {pipeline_mode = #tpu.pipeline_mode<synchronous>, transform_indices = @transform_2, window_bounds = array<i64: 128, 128>}, {pipeline_mode = #tpu.pipeline_mode<synchronous>, transform_indices = @transform_3, window_bounds = array<i64: 1, 128>}, {transform_indices = @transform_4, window_bounds = array<i64: 8, 128>}]} {
    %c0 = arith.constant 0 : index
    %c0_0 = arith.constant 0 : index
    %0 = vector.load %arg2[%c0, %c0_0] : memref<8x128xf32, #tpu.memory_space<vmem>>, vector<8x128xf32>
    %c0_1 = arith.constant 0 : index
    %c0_2 = arith.constant 0 : index
    %1 = vector.load %arg3[%c0_1, %c0_2] : memref<128x128xf32, #tpu.memory_space<vmem>>, vector<128x128xf32>
    %cst = arith.constant dense<0.000000e+00> : vector<8x128xf32>
    %2 = tpu.matmul %0, %1, %cst {dimension_numbers = #tpu.dot_dimension_numbers<[1], [0], [0], [1], [0, 0, 1, 1], [], []>} : vector<8x128xf32>, vector<128x128xf32>, vector<8x128xf32> -> vector<8x128xf32>
    %c0_3 = arith.constant 0 : index
    %c0_4 = arith.constant 0 : index
    %3 = memref.load %arg1[%c0_3, %c0_4] : memref<1x1xf32, #tpu.memory_space<smem>>
    %4 = vector.broadcast %3 : f32 to vector<8x128xf32>
    %5 = arith.mulf %2, %4 : vector<8x128xf32>
    %c0_5 = arith.constant 0 : index
    %c0_6 = arith.constant 0 : index
    %6 = vector.load %arg4[%c0_5, %c0_6] : memref<1x128xf32, #tpu.memory_space<vmem>>, vector<1x128xf32>
    %7 = vector.broadcast %6 : vector<1x128xf32> to vector<8x128xf32>
    %8 = arith.addf %5, %7 : vector<8x128xf32>
    %9 = arith.mulf %8, %8 : vector<8x128xf32>
    %cst_7 = arith.constant dense<0.000000e+00> : vector<8xf32>
    %10 = vector.multi_reduction <add>, %9, %cst_7 [1] : vector<8x128xf32> to vector<8xf32>
    %11 = vector.shape_cast %10 : vector<8xf32> to vector<8x1xf32>
    %12 = math.sqrt %11 : vector<8x1xf32>
    %cst_8 = arith.constant 9.99999993E-9 : f32
    %13 = vector.broadcast %cst_8 : f32 to vector<8x1xf32>
    %14 = arith.addf %12, %13 : vector<8x1xf32>
    %15 = tpu.reciprocal %14 : vector<8x1xf32> -> vector<8x1xf32>
    %16 = vector.broadcast %15 : vector<8x1xf32> to vector<8x128xf32>
    %17 = arith.mulf %8, %16 : vector<8x128xf32>
    %c0_9 = arith.constant 0 : index
    %c0_10 = arith.constant 0 : index
    %18 = vector.load %arg5[%c0_9, %c0_10] : memref<8x128xf32, #tpu.memory_space<vmem>>, vector<8x128xf32>
    tpu.vector_store %arg5[%c0_9, %c0_10], %17 {strides = array<i32>} : memref<8x128xf32, #tpu.memory_space<vmem>>, vector<8x128xf32>,
    return
  }
  func.func @transform_0(%arg0: i32) -> (i32, i32) {
    %c0_i32 = arith.constant 0 : i32
    %c0_i32_0 = arith.constant 0 : i32
    %c0_i32_1 = arith.constant 0 : i32
    return %c0_i32, %c0_i32_0 : i32, i32
  }
  func.func @transform_1(%arg0: i32) -> (i32, i32) {
    %c0_i32 = arith.constant 0 : i32
    %c0_i32_0 = arith.constant 0 : i32
    return %arg0, %c0_i32 : i32, i32
  }
  func.func @transform_2(%arg0: i32) -> (i32, i32) {
    %c0_i32 = arith.constant 0 : i32
    %c0_i32_0 = arith.constant 0 : i32
    %c0_i32_1 = arith.constant 0 : i32
    return %c0_i32, %c0_i32_0 : i32, i32
  }
  func.func @transform_3(%arg0: i32) -> (i32, i32) {
    %c0_i32 = arith.constant 0 : i32
    %c0_i32_0 = arith.constant 0 : i32
    %c0_i32_1 = arith.constant 0 : i32
    return %c0_i32, %c0_i32_0 : i32, i32
  }
  func.func @transform_4(%arg0: i32) -> (i32, i32) {
    %c0_i32 = arith.constant 0 : i32
    %c0_i32_0 = arith.constant 0 : i32
    return %arg0, %c0_i32 : i32, i32
  }
}

</mosaic_0001>

<llo_original>
// kernel: tpu_custom_call.1
$region0: #{tpu_custom_call.1}
  #allocation0 [shape = 'u32[]', space=smem, size = 0x4, offset = 0x4, fixed_abs, tag = 'smem constant byte address 0x4 - core index']
  #allocation1 [shape = 'u32[144,128]{1,0:T(1,128)}', space=vmem, size = 0x12000, scoped, tag = 'internal scratch']
  #allocation2 [shape = 'f32[1,1]{1,0:T(1,128)S(6)}', space=smem, size = 0x200, scoped, tag = 'scoped memory for tpu_custom_call.1']
  %s0 = inlined_call_operand.<no memory space> [shape: f32[1,1], index: 0, kind: input, shape index: {}]
  %s1 = inlined_call_operand.hbm [shape: f32[16,128], index: 1, kind: input, shape index: {}]
  %s2 = inlined_call_operand.hbm [shape: f32[128,128], index: 2, kind: input, shape index: {}]
  %s3 = inlined_call_operand.vmem [shape: f32[1,128], index: 3, kind: input, shape index: {}]
  %s4 = inlined_call_operand.hbm [shape: f32[16,128], index: 4, kind: output, shape index: {}]
  %s5 = sld [smem:[#allocation0]]
  $region57: #{tpu_custom_call.1} parent=0
    _
  %s7 = ssub.s32 1, %s5
  %s8 = scalar_select 0, %s7, %s5
  %9 = sst [smem:[#allocation2]] %s0
  $region1: #{tpu_custom_call.1} parent=0
    #allocation3 [shape = 'u8[8192]{0}', space=vmem, size = 0x2000, scoped, tag = 'input window, operand 1']
    #allocation4 [shape = 's32[2]{0}', space=sflag, size = 0x8, scoped, tag = 'scoped memory for tpu_custom_call.1']
    #allocation5 [shape = 's32[2]{0}', space=sflag, size = 0x8, scoped, tag = 'scoped memory for tpu_custom_call.1']
    #allocation6 [shape = 'u8[65536]{0}', space=vmem, size = 0x10000, scoped, tag = 'input window, operand 2, single buffered']
    #allocation7 [shape = 's32[1]{0}', space=sflag, size = 0x4, scoped, tag = 'scoped memory for tpu_custom_call.1']
    #allocation8 [shape = 'u8[8192]{0}', space=vmem, size = 0x2000, scoped, tag = 'output window, operand 0']
    %10 = vsyncpa [#allocation4], 0
    %s11 = scalar_lea.sflag [#allocation4], 1
    %12 = vsyncpa %s11, 0
    %13 = vsyncpa [#allocation7], 0
    %14 = vsyncpa [#allocation5], 0
    %s15 = scalar_lea.sflag [#allocation5], 1
    %16 = vsyncpa %s15, 0
    loop: start=0, step=1, limit=4
    $region2: #{tpu_custom_call.1} parent=1 // loop_pre_header
      _
    $region3: #{tpu_custom_call.1} parent=1 // loop_header
      %s18 = sphi 0, %s22
      %p19 = scmp.ge.s32.totalorder %s18, 4
      %s26 = sphi 0, %s26
      %s28 = sphi 0, %s26
      %s29 = sphi 0, %s28
      %s43 = sphi 0, %s29
      %s49 = sphi 0, %s51
      %s52 = sphi 0, %s49
      %s53 = sphi 0, %s52
      %s69 = sphi 0, %s53
      %s73 = sphi 0, %s73
      %s75 = sphi 0, %s73
      %s76 = sphi 0, %s75
      %s90 = sphi 0, %s76
      %s94 = sphi 0, %s94
      %s96 = sphi 0, %s94
      %s97 = sphi 0, %s96
      %s111 = sphi 0, %s97
      %s117 = sphi 0, %s119
      %s120 = sphi 0, %s117
      %s121 = sphi 0, %s120
      %s137 = sphi 0, %s121
    $region4: #{tpu_custom_call.1} parent=1 // loop_header_branch
      %21 = sbr.rel (%p19) target = $region8
    $region5: #{tpu_custom_call.1} parent=1 // loop_body
      %s23 = ssub.s32 %s18, 1
      %s24 = ssub.s32 %s18, 2
      %s25 = sadd.s32 %s18, 1
      %s27 = sadd.s32 %s26, 1
      %p30 = scmp.eq.s32.totalorder %s18, 1
      %p31 = scmp.ne.s32.totalorder %s26, %s28
      %p32 = scmp.eq.s32.totalorder %s18, 0
      %p33 = por %p31, %p32
      %p34 = scmp.ne.s32.totalorder %s26, %s28
      %p35 = scmp.eq.s32.totalorder %s23, 1
      %p36 = por %p34, %p35
      %p37 = scmp.ne.s32.totalorder %s28, %s29
      %p38 = scmp.eq.s32.totalorder %s23, 0
      %p39 = por %p37, %p38
      %p40 = scmp.ne.s32.totalorder %s28, %s29
      %p41 = scmp.eq.s32.totalorder %s24, 1
      %p42 = por %p40, %p41
      %p44 = scmp.ne.s32.totalorder %s29, %s43
      %p45 = scmp.eq.s32.totalorder %s24, 0
      %p46 = por %p44, %p45
      %s47 = ssub.s32 %s18, %s25
      %p48 = scmp.eq.s32.totalorder %s47, 0
      %s50 = sadd.s32 %s49, 1
      %s51 = scalar_select %p48, %s49, %s50
      %p54 = pneg %p48
      %p55 = scmp.eq.s32.totalorder %s18, 1
      %p56 = por %p54, %p55
      %p57 = scmp.ne.s32.totalorder %s49, %s52
      %p58 = scmp.eq.s32.totalorder %s18, 0
      %p59 = por %p57, %p58
      %p60 = scmp.ne.s32.totalorder %s49, %s52
      %p61 = scmp.eq.s32.totalorder %s23, 1
      %p62 = por %p60, %p61
      %p63 = scmp.ne.s32.totalorder %s52, %s53
      %p64 = scmp.eq.s32.totalorder %s23, 0
      %p65 = por %p63, %p64
      %p66 = scmp.ne.s32.totalorder %s52, %s53
      %p67 = scmp.eq.s32.totalorder %s24, 1
      %p68 = por %p66, %p67
      %p70 = scmp.ne.s32.totalorder %s53, %s69
      %p71 = scmp.eq.s32.totalorder %s24, 0
      %p72 = por %p70, %p71
      %s74 = sadd.s32 %s73, 1
      %p77 = scmp.eq.s32.totalorder %s18, 1
      %p78 = scmp.ne.s32.totalorder %s73, %s75
      %p79 = scmp.eq.s32.totalorder %s18, 0
      %p80 = por %p78, %p79
      %p81 = scmp.ne.s32.totalorder %s73, %s75
      %p82 = scmp.eq.s32.totalorder %s23, 1
      %p83 = por %p81, %p82
      %p84 = scmp.ne.s32.totalorder %s75, %s76
      %p85 = scmp.eq.s32.totalorder %s23, 0
      %p86 = por %p84, %p85
      %p87 = scmp.ne.s32.totalorder %s75, %s76
      %p88 = scmp.eq.s32.totalorder %s24, 1
      %p89 = por %p87, %p88
      %p91 = scmp.ne.s32.totalorder %s76, %s90
      %p92 = scmp.eq.s32.totalorder %s24, 0
      %p93 = por %p91, %p92
      %s95 = sadd.s32 %s94, 1
      %p98 = scmp.eq.s32.totalorder %s18, 1
      %p99 = scmp.ne.s32.totalorder %s94, %s96
      %p100 = scmp.eq.s32.totalorder %s18, 0
      %p101 = por %p99, %p100
      %p102 = scmp.ne.s32.totalorder %s94, %s96
      %p103 = scmp.eq.s32.totalorder %s23, 1
      %p104 = por %p102, %p103
      %p105 = scmp.ne.s32.totalorder %s96, %s97
      %p106 = scmp.eq.s32.totalorder %s23, 0
      %p107 = por %p105, %p106
      %p108 = scmp.ne.s32.totalorder %s96, %s97
      %p109 = scmp.eq.s32.totalorder %s24, 1
      %p110 = por %p108, %p109
      %p112 = scmp.ne.s32.totalorder %s97, %s111
      %p113 = scmp.eq.s32.totalorder %s24, 0
      %p114 = por %p112, %p113
      %s115 = ssub.s32 %s18, %s25
      %p116 = scmp.eq.s32.totalorder %s115, 0
      %s118 = sadd.s32 %s117, 1
      %s119 = scalar_select %p116, %s117, %s118
      %p122 = pneg %p116
      %p123 = scmp.eq.s32.totalorder %s18, 1
      %p124 = por %p122, %p123
      %p125 = scmp.ne.s32.totalorder %s117, %s120
      %p126 = scmp.eq.s32.totalorder %s18, 0
      %p127 = por %p125, %p126
      %p128 = scmp.ne.s32.totalorder %s117, %s120
      %p129 = scmp.eq.s32.totalorder %s23, 1
      %p130 = por %p128, %p129
      %p131 = scmp.ne.s32.totalorder %s120, %s121
      %p132 = scmp.eq.s32.totalorder %s23, 0
      %p133 = por %p131, %p132
      %p134 = scmp.ne.s32.totalorder %s120, %s121
      %p135 = scmp.eq.s32.totalorder %s24, 1
      %p136 = por %p134, %p135
      %p138 = scmp.ne.s32.totalorder %s121, %s137
      %p139 = scmp.eq.s32.totalorder %s24, 0
      %p140 = por %p138, %p139
      %p141 = scmp.le.s32.totalorder 1, %s18
      %p142 = scmp.lt.s32.totalorder %s18, 3
      %p143 = pnand %p141, %p142
      %p144 = pneg %p143
      // Predicated region
      $region9: #{tpu_custom_call.1} parent=5 // pred_check
        _
      $region10: #{tpu_custom_call.1} parent=5 // pred_check_branch
        %146 = sbr.rel (%p143) target = $region12
      $region11: #{tpu_custom_call.1} parent=5 // pred_region
        %s147 = ssub.s32 %s18, 1
        // Predicated region
        $region13: #{tpu_custom_call.1} parent=11 // pred_check
          %p148 = pneg %p39
        $region14: #{tpu_custom_call.1} parent=11 // pred_check_branch
          %150 = sbr.rel (%p148) target = $region16
        $region15: #{tpu_custom_call.1} parent=11 // pred_region
          _
        $region16: #{tpu_custom_call.1} parent=11 // pred_fallthru
          _
        // Predicated region
        $region17: #{tpu_custom_call.1} parent=11 // pred_check
          %p151 = pneg %p86
        $region18: #{tpu_custom_call.1} parent=11 // pred_check_branch
          %153 = sbr.rel (%p151) target = $region20
        $region19: #{tpu_custom_call.1} parent=11 // pred_region
          %s155 = ssub.s32 2048, 2048
          %156 = vsyncadd [#allocation7], %s155
          %s157 = sshll.u32 [#allocation6], 4
          %s158 = int_to_ptr.vmem [resolvable:$true] %s157
          %163 = dma.hbm_to_vmem [thread:$0]  %s2, 2048, %s158, [#allocation7], 128, 128, 8
        $region20: #{tpu_custom_call.1} parent=11 // pred_fallthru
          _
        // Predicated region
        $region21: #{tpu_custom_call.1} parent=11 // pred_check
          %p164 = pneg %p107
        $region22: #{tpu_custom_call.1} parent=11 // pred_check_branch
          %166 = sbr.rel (%p164) target = $region24
        $region23: #{tpu_custom_call.1} parent=11 // pred_region
          _
        $region24: #{tpu_custom_call.1} parent=11 // pred_fallthru
          _
      $region12: #{tpu_custom_call.1} parent=5 // pred_fallthru
        _
      %p167 = scmp.lt.s32.totalorder %s18, 2
      // Predicated region
      $region25: #{tpu_custom_call.1} parent=5 // pred_check
        %p168 = pneg %p167
      $region26: #{tpu_custom_call.1} parent=5 // pred_check_branch
        %170 = sbr.rel (%p168) target = $region28
      $region27: #{tpu_custom_call.1} parent=5 // pred_region
        // Predicated region
        $region29: #{tpu_custom_call.1} parent=27 // pred_check
          %p171 = pneg %p59
        $region30: #{tpu_custom_call.1} parent=27 // pred_check_branch
          %173 = sbr.rel (%p171) target = $region32
        $region31: #{tpu_custom_call.1} parent=27 // pred_region
          %s174 = sand.u32 %s49, 1
          %s175 = scalar_lea.sflag [#allocation4], %s174
          %s176 = sand.u32 %s49, 1
          %s177 = smul.addr %s176, 8
          %s178 = scalar_lea.vmem [#allocation3], %s177
          %s180 = ssub.s32 128, 128
          %181 = vsyncadd %s175, %s180
          %s182 = smul.addr %s18, 128
          %s183 = scalar_lea.hbm %s1, %s182
          %s185 = sshll.u32 %s178, 4
          %s186 = int_to_ptr.vmem [resolvable:$true] %s185
          %188 = dma.hbm_to_vmem [thread:$0]  %s183, 128, %s186, %s175
        $region32: #{tpu_custom_call.1} parent=27 // pred_fallthru
          _
      $region28: #{tpu_custom_call.1} parent=5 // pred_fallthru
        _
      %p189 = scmp.le.s32.totalorder 1, %s18
      %p190 = scmp.lt.s32.totalorder %s18, 3
      %p191 = pnand %p189, %p190
      %p192 = pneg %p191
      // Predicated region
      $region33: #{tpu_custom_call.1} parent=5 // pred_check
        _
      $region34: #{tpu_custom_call.1} parent=5 // pred_check_branch
        %194 = sbr.rel (%p191) target = $region36
      $region35: #{tpu_custom_call.1} parent=5 // pred_region
        %s195 = ssub.s32 %s18, 1
        %s196 = sand.u32 %s52, 1
        %s197 = scalar_lea.sflag [#allocation4], %s196
        %s198 = sand.u32 %s52, 1
        %s199 = smul.addr %s198, 8
        %s200 = scalar_lea.vmem [#allocation3], %s199
        // Predicated region
        $region37: #{tpu_custom_call.1} parent=35 // pred_check
          %p201 = pneg %p65
        $region38: #{tpu_custom_call.1} parent=35 // pred_check_branch
          %203 = sbr.rel (%p201) target = $region40
        $region39: #{tpu_custom_call.1} parent=35 // pred_region
          %204 = dma.done %s197, 128
        $region40: #{tpu_custom_call.1} parent=35 // pred_fallthru
          _
        // Predicated region
        $region41: #{tpu_custom_call.1} parent=35 // pred_check
          %p205 = pneg %p86
        $region42: #{tpu_custom_call.1} parent=35 // pred_check_branch
          %207 = sbr.rel (%p205) target = $region44
        $region43: #{tpu_custom_call.1} parent=35 // pred_region
          %208 = dma.done [#allocation7], 2048
        $region44: #{tpu_custom_call.1} parent=35 // pred_fallthru
          _
        %p209 = pneg %p39
        %p210 = pneg %p36
        %s211 = sand.u32 %s52, 1
        %s212 = scalar_lea.sflag [#allocation4], %s211
        %s213 = sand.u32 %s52, 1
        %s214 = smul.addr %s213, 8
        %s215 = scalar_lea.vmem [#allocation3], %s214
        %p216 = pneg %p65
        %p217 = pneg %p62
        %p218 = pneg %p86
        %p219 = pneg %p83
        %p220 = pneg %p107
        %p221 = pneg %p104
        %p222 = pneg %p133
        %p223 = pneg %p130
        %s224 = sand.u32 %s120, 1
        %s225 = scalar_lea.sflag [#allocation5], %s224
        %s226 = sand.u32 %s120, 1
        %s227 = smul.addr %s226, 8
        %s228 = scalar_lea.vmem [#allocation8], %s227
        %v229 = vld [vmem:[%s200] sm:$0xff]
        %v230 = vld [vmem:[#allocation6] sm:$0xff]
        %v231 = vld [vmem:[#allocation6 + $0x8] sm:$0xff]
        %v232 = vld [vmem:[#allocation6 + $0x10] sm:$0xff]
        %v233 = vld [vmem:[#allocation6 + $0x18] sm:$0xff]
        %v234 = vld [vmem:[#allocation6 + $0x20] sm:$0xff]
        %v235 = vld [vmem:[#allocation6 + $0x28] sm:$0xff]
        %v236 = vld [vmem:[#allocation6 + $0x30] sm:$0xff]
        %v237 = vld [vmem:[#allocation6 + $0x38] sm:$0xff]
        %v238 = vld [vmem:[#allocation6 + $0x40] sm:$0xff]
        %v239 = vld [vmem:[#allocation6 + $0x48] sm:$0xff]
        %v240 = vld [vmem:[#allocation6 + $0x50] sm:$0xff]
        %v241 = vld [vmem:[#allocation6 + $0x58] sm:$0xff]
        %v242 = vld [vmem:[#allocation6 + $0x60] sm:$0xff]
        %v243 = vld [vmem:[#allocation6 + $0x68] sm:$0xff]
        %v244 = vld [vmem:[#allocation6 + $0x70] sm:$0xff]
        %v245 = vld [vmem:[#allocation6 + $0x78] sm:$0xff]
        %246 = vmatprep.subr.mxu0 0.0
        %247 = vmatpush1.msra.mxu0 %v230
        %248 = vmatprep.subr.mxu0 0.0
        %249 = vmatpush1.msra.mxu0 %v231
        %250 = vmatprep.subr.mxu0 0.0
        %251 = vmatpush1.msra.mxu0 %v232
        %252 = vmatprep.subr.mxu0 0.0
        %253 = vmatpush1.msra.mxu0 %v233
        %254 = vmatprep.subr.mxu0 0.0
        %255 = vmatpush1.msra.mxu0 %v234
        %256 = vmatprep.subr.mxu0 0.0
        %257 = vmatpush1.msra.mxu0 %v235
        %258 = vmatprep.subr.mxu0 0.0
        %259 = vmatpush1.msra.mxu0 %v236
        %260 = vmatprep.subr.mxu0 0.0
        %261 = vmatpush1.msra.mxu0 %v237
        %262 = vmatprep.subr.mxu0 0.0
        %263 = vmatpush1.msra.mxu0 %v238
        %264 = vmatprep.subr.mxu0 0.0
        %265 = vmatpush1.msra.mxu0 %v239
        %266 = vmatprep.subr.mxu0 0.0
        %267 = vmatpush1.msra.mxu0 %v240
        %268 = vmatprep.subr.mxu0 0.0
        %269 = vmatpush1.msra.mxu0 %v241
        %270 = vmatprep.subr.mxu0 0.0
        %271 = vmatpush1.msra.mxu0 %v242
        %272 = vmatprep.subr.mxu0 0.0
        %273 = vmatpush1.msra.mxu0 %v243
        %274 = vmatprep.subr.mxu0 0.0
        %275 = vmatpush1.msra.mxu0 %v244
        %276 = vmatprep.subr.mxu0 0.0
        %277 = vmatpush1.msra.mxu0 %v245
        %278 = vmatprep.subr.mxu0 0.0
        %279 = vmatpush1.msra.mxu0 0.0
        %280 = vmatprep.subr.mxu0 0.0
        %281 = vmatpush1.msra.mxu0 0.0
        %282 = vmatprep.subr.mxu0 0.0
        %283 = vmatpush1.msra.mxu0 0.0
        %284 = vmatprep.subr.mxu0 0.0
        %285 = vmatpush1.msra.mxu0 0.0
        %286 = vmatprep.subr.mxu0 0.0
        %287 = vmatpush1.msra.mxu0 0.0
        %288 = vmatprep.subr.mxu0 0.0
        %289 = vmatpush1.msra.mxu0 0.0
        %290 = vmatprep.subr.mxu0 0.0
        %291 = vmatpush1.msra.mxu0 0.0
        %292 = vmatprep.subr.mxu0 0.0
        %293 = vmatpush1.msra.mxu0 0.0
        %294 = vmatprep.subr.mxu0 0.0
        %295 = vmatpush1.msra.mxu0 0.0
        %296 = vmatprep.subr.mxu0 0.0
        %297 = vmatpush1.msra.mxu0 0.0
        %298 = vmatprep.subr.mxu0 0.0
        %299 = vmatpush1.msra.mxu0 0.0
        %300 = vmatprep.subr.mxu0 0.0
        %301 = vmatpush1.msra.mxu0 0.0
        %302 = vmatprep.subr.mxu0 0.0
        %303 = vmatpush1.msra.mxu0 0.0
        %304 = vmatprep.subr.mxu0 0.0
        %305 = vmatpush1.msra.mxu0 0.0
        %306 = vmatprep.subr.mxu0 0.0
        %307 = vmatpush1.msra.mxu0 0.0
        %308 = vmatprep.subr.mxu0 0.0
        %309 = vmatpush1.msra.mxu0 0.0
        %310 = vmatprep.mubr.f32.mxu0 0.0
        %311 = vmatmul.mubr.f32.gmra.mrb[0].mxu0 %v229
        %v312 = vpop.f32.mrb[0].mxu0
        %v313 = vadd.f32 0.0, %v312
        %v314 = vpop.f32.mrb[0].mxu0
        %315 = vdwg.mxu0
        %s316 = sld [smem:[#allocation2]]
        %v317 = vstv %s316
        %v318 = vmul.f32 %v313, %v317
        %v319 = vld [vmem:[%s3] sm:$0x1]
        %v321 = vlaneseq
        %v322 = vshrl.u32 %v321, 7
        %v323 = vsub.s32 0, %v322
        %v324 = vrot.slane %v319, %v323
        %v326 = vadd.f32 %v318, %v324
        %v327 = vmul.f32 %v326, %v326
        %328 = vadd.xlane.f32.xlu0 %v327
        %v329 = vpop.xlane.xlu0 %328
        %v330 = vrsqrt.pop %v329
        %v331 = vmul.f32 %v329, %v330
        %vm332 = vcmp.eq.f32.partialorder %v329, inf
        %v333 = vsel %vm332, %v329, %v331
        %vm334 = vcmp.eq.f32.partialorder %v329, 0.0
        %v335 = vand.u32 %v329, 2147483648
        %v336 = vsel %vm334, %v335, %v333
        %v337 = vadd.f32 %v336, 1e-08
        %v338 = vrcp.pop %v337
        %v339 = vmul.f32 %v326, %v338
        %340 = vst [vmem:[%s228] sm:$0xff] %v339
        %s341 = sand.u32 %s120, 1
        %s342 = scalar_lea.sflag [#allocation5], %s341
        %s343 = sand.u32 %s120, 1
        %s344 = smul.addr %s343, 8
        %s345 = scalar_lea.vmem [#allocation8], %s344
        // Predicated region
        $region45: #{tpu_custom_call.1} parent=35 // pred_check
          %p346 = pneg %p130
        $region46: #{tpu_custom_call.1} parent=35 // pred_check_branch
          %348 = sbr.rel (%p346) target = $region48
        $region47: #{tpu_custom_call.1} parent=35 // pred_region
          %s350 = ssub.s32 128, 128
          %351 = vsyncadd %s342, %s350
          %s352 = smul.addr %s23, 128
          %s353 = scalar_lea.hbm %s4, %s352
          %s355 = sshll.u32 %s345, 4
          %s356 = int_to_ptr.vmem [resolvable:$true] %s355
          %358 = dma.vmem_to_hbm [thread:$0]  %s356, 128, %s353, %s342
        $region48: #{tpu_custom_call.1} parent=35 // pred_fallthru
          _
      $region36: #{tpu_custom_call.1} parent=5 // pred_fallthru
        _
      %p359 = scmp.le.s32.totalorder 2, %s18
      // Predicated region
      $region49: #{tpu_custom_call.1} parent=5 // pred_check
        %p360 = pneg %p359
      $region50: #{tpu_custom_call.1} parent=5 // pred_check_branch
        %362 = sbr.rel (%p360) target = $region52
      $region51: #{tpu_custom_call.1} parent=5 // pred_region
        %s363 = ssub.s32 %s18, 2
        // Predicated region
        $region53: #{tpu_custom_call.1} parent=51 // pred_check
          %p364 = pneg %p136
        $region54: #{tpu_custom_call.1} parent=51 // pred_check_branch
          %366 = sbr.rel (%p364) target = $region56
        $region55: #{tpu_custom_call.1} parent=51 // pred_region
          %s367 = sand.u32 %s121, 1
          %s368 = scalar_lea.sflag [#allocation5], %s367
          %s369 = sand.u32 %s121, 1
          %s370 = smul.addr %s369, 8
          %s371 = scalar_lea.vmem [#allocation8], %s370
          %372 = dma.done %s368, 128
        $region56: #{tpu_custom_call.1} parent=51 // pred_fallthru
          _
      $region52: #{tpu_custom_call.1} parent=5 // pred_fallthru
        _
    $region6: #{tpu_custom_call.1} parent=1 // loop_footer
      %s22 = sadd.s32 1, %s18
    $region7: #{tpu_custom_call.1} parent=1 // loop_footer_branch
      %17 = sbr.rel target = $region3
    $region8: #{tpu_custom_call.1} parent=1 // loop_exit
      _
    %373 = vsyncpa [#allocation4], 1
    %s374 = scalar_lea.sflag [#allocation4], 1
    %375 = vsyncpa %s374, 1
    %376 = vsyncpa [#allocation7], 1
    %377 = vsyncpa [#allocation5], 1
    %s378 = scalar_lea.sflag [#allocation5], 1
    %379 = vsyncpa %s378, 1

</llo_original>
